<compile_context>
chip_gen: v7x
topology: tpu7x:2x2x1
jax: 0.10.0
libtpu: 0.0.40
codegen_flags: <defaults>
</compile_context>

<pallas_src>
import jax
import jax.numpy as jnp
import numpy as np
from jax.experimental import pallas as pl
from jax.experimental.pallas import tpu as pltpu


# ----------------------------- configuration --------------------------------
B = 2            # batch
K = 3            # number of objects (slots)
OBJECT_DIM = 32  # object_dim
DEC_DIM = 64     # decoder_input_dim (inp_transform: 32 -> 64)
P = 8            # num_patches
OUT_DIM = 48     # output_dim (per-patch feature dim)
H = 128          # hidden width of the MLP decoder (stands in for 1024)
OP1 = OUT_DIM + 1
OUT_PAD = 128    # lane-dense padded head width (>= OUT_DIM + K, multiple of 128)


# ------------------------------- fused kernel --------------------------------
def make_fused_kernel(bt):
    """Kernel factory: one grid step decodes `bt` batch elements end to end."""
    f32 = jnp.float32
    bf16 = jnp.bfloat16

    def kernel(obj_ref, pos_ref,
               w_in_ref, b_in_ref,
               w1_ref, b1_ref,
               w2_ref, b2_ref,
               w3_ref, b3_ref,
               w4p_ref, b4p_ref,
               w4a_ref, b4a_ref,
               out_ref):
        obj = obj_ref[...].reshape(bt * K, OBJECT_DIM).astype(bf16)          # (bt*K, OBJ)

        # inp_transform: Linear(object_dim -> decoder_input_dim)
        x = jnp.dot(obj, w_in_ref[...], preferred_element_type=f32) + b_in_ref[...]  # (bt*K, D)

        # Layer 1 with the pos-embed contribution hoisted out of the big matmul.
        obj_h = jnp.dot(x.astype(bf16), w1_ref[...], preferred_element_type=f32)     # (bt*K, H)
        pos_h = jnp.dot(pos_ref[...], w1_ref[...], preferred_element_type=f32)       # (P, H)
        h = jnp.maximum(obj_h[:, None, :] + pos_h[None, :, :] + b1_ref[...], 0.0)    # (bt*K, P, H)

        # Layers 2/3: all bt*K*P rows in one MXU call each.
        h = h.reshape(bt * K * P, H)
        h = jnp.maximum(
            jnp.dot(h.astype(bf16), w2_ref[...], preferred_element_type=f32) + b2_ref[...], 0.0)
        h = jnp.maximum(
            jnp.dot(h.astype(bf16), w3_ref[...], preferred_element_type=f32) + b3_ref[...], 0.0)
        hb = h.astype(bf16)

        # Lane-dense heads:
        #   patches head: lanes [0, OUT_DIM) hold patch features, rest exactly 0.
        #   alpha   head: the alpha-logit column replicated across all 128 lanes.
        patches = jnp.dot(hb, w4p_ref[...], preferred_element_type=f32) + b4p_ref[...]
        logits = jnp.dot(hb, w4a_ref[...], preferred_element_type=f32) + b4a_ref[...]
        patches = patches.reshape(bt, K, P, OUT_PAD)
        logits = logits.reshape(bt, K, P, OUT_PAD)

        # softmax over the K objects — elementwise across full (P, 128) tiles,
        # reciprocal on the EUP (free bundle slot).
        m = jnp.max(logits, axis=1, keepdims=True)
        e = jnp.exp(logits - m)
        alpha = e * pl.reciprocal(jnp.sum(e, axis=1, keepdims=True), approx=True)  # (bt,K,P,128)

        # reconstruction: weighted sum of patches (lanes >= OUT_DIM stay exactly 0).
        recon = jnp.sum(patches * alpha, axis=1)                                    # (bt, P, 128)

        # masks: route alpha_k to lane OUT_DIM + k of the same slab (K small, unrolled).
        lane = jax.lax.broadcasted_iota(jnp.int32, (bt, P, OUT_PAD), 2)
        mask_slab = jnp.zeros((bt, P, OUT_PAD), f32)
        for k in range(K):
            mask_slab = mask_slab + jnp.where(lane == OUT_DIM + k, alpha[:, k], 0.0)

        # single unmasked full-width store.
        out_ref[...] = (recon + mask_slab).astype(out_ref.dtype)

    return kernel


def _pick_batch_tile(b_flat):
    for bt in (8, 4, 2, 1):
        if b_flat % bt == 0:
            return bt
    return 1


# ------------------------------- wrapper --------------------------------------
def patch_decoder_forward(object_features, prepared):
    """object_features: (..., K, OBJECT_DIM) float32 (softmax over axis -2 objects)."""
    assert object_features.ndim >= 3
    initial_shape = object_features.shape[:-1]
    assert initial_shape[-1] == K
    b_flat = int(np.prod(initial_shape[:-1]))
    obj = object_features.reshape(b_flat, K, OBJECT_DIM)

    bt = _pick_batch_tile(b_flat)
    grid = (b_flat // bt,)

    full = lambda shape: pl.BlockSpec(shape, lambda b: tuple(0 for _ in shape))

    slab = pl.pallas_call(
        make_fused_kernel(bt),
        out_shape=jax.ShapeDtypeStruct((b_flat, P, OUT_PAD), jnp.float32),
        grid=grid,
        in_specs=[
            pl.BlockSpec((bt, K, OBJECT_DIM), lambda b: (b, 0, 0)),  # objects of this tile
            full((P, DEC_DIM)),                                      # pos_embed (bf16)
            full((OBJECT_DIM, DEC_DIM)), full((1, DEC_DIM)),         # inp_transform
            full((DEC_DIM, H)), full((1, H)),                        # MLP layer 1
            full((H, H)), full((1, H)),                              # MLP layer 2
            full((H, H)), full((1, H)),                              # MLP layer 3
            full((H, OUT_PAD)), full((1, OUT_PAD)),                  # padded patches head
            full((H, OUT_PAD)), full((1, OUT_PAD)),                  # lane-replicated alpha head
        ],
        out_specs=pl.BlockSpec((bt, P, OUT_PAD), lambda b: (b, 0, 0)),
        compiler_params=pltpu.CompilerParams(
            dimension_semantics=("parallel",)),  # shards over the 2 TCs on v7x when grid > 1
    )(obj, prepared["pos"],
      prepared["w_in"], prepared["b_in"],
      prepared["w1"], prepared["b1"],
      prepared["w2"], prepared["b2"],
      prepared["w3"], prepared["b3"],
      prepared["w4p"], prepared["b4p"],
      prepared["w4a"], prepared["b4a"])

    # slice the padded slab back outside the kernel (cheap XLA ops)
    recon = slab[:, :, :OUT_DIM].reshape(*initial_shape[:-1], P, OUT_DIM)
    masks = jnp.transpose(slab[:, :, OUT_DIM:OUT_DIM + K], (0, 2, 1))
    masks = masks.reshape(*initial_shape[:-1], K, P)
    # TODO(synk): masks_as_image needs resize_patches_to_image (only when `image` given).
    return recon, masks, None


# ------------------------- deterministic parameters ---------------------------
def make_params(key):
    ks = jax.random.split(key, 12)

    def xavier(k, shape):  # shape = (fan_in, fan_out)
        limit = float(np.sqrt(6.0 / (shape[0] + shape[1])))
        return jax.random.uniform(k, shape, jnp.float32, -limit, limit)

    def bias(k, n, fan_in):  # default nn.Linear bias init
        bound = float(1.0 / np.sqrt(fan_in))
        return jax.random.uniform(k, (n,), jnp.float32, -bound, bound)

    return {
        # inp_transform: xavier W, zero b (as in the module)
        "w_in": xavier(ks[0], (OBJECT_DIM, DEC_DIM)),
        "b_in": jnp.zeros((DEC_DIM,), jnp.float32),
        # pos_embed: randn(1, P, D) * 0.02  (stored as (P, D))
        "pos": 0.02 * jax.random.normal(ks[1], (P, DEC_DIM), jnp.float32),
        # MLP decoder weights, stored (in, out); biases use default Linear init
        "w1": xavier(ks[2], (DEC_DIM, H)), "b1": bias(ks[6], H, DEC_DIM),
        "w2": xavier(ks[3], (H, H)),       "b2": bias(ks[7], H, H),
        "w3": xavier(ks[4], (H, H)),       "b3": bias(ks[8], H, H),
        "w4": xavier(ks[5], (H, OP1)),     "b4": bias(ks[9], OP1, H),
    }


def prepare_params(p):
    """Kernel-side layout: bf16 weights, f32 row biases, padded / replicated heads."""
    bf = lambda a: a.astype(jnp.bfloat16)
    row = lambda a: a.reshape(1, -1).astype(jnp.float32)
    w4, b4 = p["w4"], p["b4"]
    w4p = jnp.zeros((H, OUT_PAD), jnp.float32).at[:, :OUT_DIM].set(w4[:, :OUT_DIM])
    b4p = jnp.zeros((1, OUT_PAD), jnp.float32).at[:, :OUT_DIM].set(b4[:OUT_DIM])
    w4a = jnp.tile(w4[:, OUT_DIM:OUT_DIM + 1], (1, OUT_PAD))
    b4a = jnp.full((1, OUT_PAD), b4[OUT_DIM], jnp.float32)
    return {
        "pos": bf(p["pos"]),
        "w_in": bf(p["w_in"]), "b_in": row(p["b_in"]),
        "w1": bf(p["w1"]), "b1": row(p["b1"]),
        "w2": bf(p["w2"]), "b2": row(p["b2"]),
        "w3": bf(p["w3"]), "b3": row(p["b3"]),
        "w4p": bf(w4p), "b4p": b4p,
        "w4a": bf(w4a), "b4a": b4a,
    }


# ------------------------------- reference ------------------------------------
def reference_forward(object_features, p):
    """Plain-JAX mixed-precision reference (bf16 matmuls, f32 accumulation)."""
    bf = lambda a: a.astype(jnp.bfloat16)
    f32 = jnp.float32
    bk = B * K
    x = jnp.dot(bf(object_features.reshape(bk, OBJECT_DIM)), bf(p["w_in"]),
                preferred_element_type=f32) + p["b_in"]
    x = x[:, None, :] + p["pos"][None]                  # (BK, P, D)
    h = jax.nn.relu(jnp.dot(bf(x), bf(p["w1"]), preferred_element_type=f32) + p["b1"])
    h = jax.nn.relu(jnp.dot(bf(h), bf(p["w2"]), preferred_element_type=f32) + p["b2"])
    h = jax.nn.relu(jnp.dot(bf(h), bf(p["w3"]), preferred_element_type=f32) + p["b3"])
    out = jnp.dot(bf(h), bf(p["w4"]), preferred_element_type=f32) + p["b4"]
    out = out.reshape(B, K, P, OP1)
    patches, logits = out[..., :OUT_DIM], out[..., OUT_DIM:]
    alpha = jax.nn.softmax(logits, axis=1)              # softmax over K (dim=-3)
    recon = jnp.sum(patches * alpha, axis=1)            # (B, P, OUT_DIM)
    masks = alpha[..., 0]                               # (B, K, P)
    return recon, masks


# --------------------------------- main ----------------------------------------
if __name__ == "__main__":
    key = jax.random.PRNGKey(0)
    k_obj, k_par = jax.random.split(key)
    params = make_params(k_par)
    prepared = prepare_params(params)
    object_features = jax.random.normal(k_obj, (B, K, OBJECT_DIM), jnp.float32)

    recon, masks, masks_as_image = patch_decoder_forward(object_features, prepared)
    jax.block_until_ready((recon, masks))

    r_ref, m_ref = reference_forward(object_features, params)
    assert recon.shape == (B, P, OUT_DIM) and masks.shape == (B, K, P)
    np.testing.assert_allclose(np.asarray(recon), np.asarray(r_ref), rtol=1e-2, atol=1e-2)
    np.testing.assert_allclose(np.asarray(masks), np.asarray(m_ref), rtol=1e-2, atol=1e-2)

    print("KERNEL_OK")
</pallas_src>

<mosaic_0001>
module attributes {stable_mosaic.version = 11 : i64} {
  func.func @kernel(%arg0: i32, %arg1: memref<2x3x32xf32, #tpu.memory_space<vmem>>, %arg2: memref<8x64xbf16, #tpu.memory_space<vmem>>, %arg3: memref<32x64xbf16, #tpu.memory_space<vmem>>, %arg4: memref<1x64xf32, #tpu.memory_space<vmem>>, %arg5: memref<64x128xbf16, #tpu.memory_space<vmem>>, %arg6: memref<1x128xf32, #tpu.memory_space<vmem>>, %arg7: memref<128x128xbf16, #tpu.memory_space<vmem>>, %arg8: memref<1x128xf32, #tpu.memory_space<vmem>>, %arg9: memref<128x128xbf16, #tpu.memory_space<vmem>>, %arg10: memref<1x128xf32, #tpu.memory_space<vmem>>, %arg11: memref<128x128xbf16, #tpu.memory_space<vmem>>, %arg12: memref<1x128xf32, #tpu.memory_space<vmem>>, %arg13: memref<128x128xbf16, #tpu.memory_space<vmem>>, %arg14: memref<1x128xf32, #tpu.memory_space<vmem>>, %arg15: memref<2x8x128xf32, #tpu.memory_space<vmem>>) attributes {dimension_semantics = [#tpu.dimension_semantics<parallel>], iteration_bounds = array<i64: 1>, scalar_prefetch = 0 : i64, scratch_operands = 0 : i64, tpu.core_type = #tpu.core_type<tc>, window_params = [{transform_indices = @transform_0, window_bounds = array<i64: 2, 3, 32>}, {pipeline_mode = #tpu.pipeline_mode<synchronous>, transform_indices = @transform_1, window_bounds = array<i64: 8, 64>}, {pipeline_mode = #tpu.pipeline_mode<synchronous>, transform_indices = @transform_2, window_bounds = array<i64: 32, 64>}, {pipeline_mode = #tpu.pipeline_mode<synchronous>, transform_indices = @transform_3, window_bounds = array<i64: 1, 64>}, {pipeline_mode = #tpu.pipeline_mode<synchronous>, transform_indices = @transform_4, window_bounds = array<i64: 64, 128>}, {pipeline_mode = #tpu.pipeline_mode<synchronous>, transform_indices = @transform_5, window_bounds = array<i64: 1, 128>}, {pipeline_mode = #tpu.pipeline_mode<synchronous>, transform_indices = @transform_6, window_bounds = array<i64: 128, 128>}, {pipeline_mode = #tpu.pipeline_mode<synchronous>, transform_indices = @transform_7, window_bounds = array<i64: 1, 128>}, {pipeline_mode = #tpu.pipeline_mode<synchronous>, transform_indices = @transform_8, window_bounds = array<i64: 128, 128>}, {pipeline_mode = #tpu.pipeline_mode<synchronous>, transform_indices = @transform_9, window_bounds = array<i64: 1, 128>}, {pipeline_mode = #tpu.pipeline_mode<synchronous>, transform_indices = @transform_10, window_bounds = array<i64: 128, 128>}, {pipeline_mode = #tpu.pipeline_mode<synchronous>, transform_indices = @transform_11, window_bounds = array<i64: 1, 128>}, {pipeline_mode = #tpu.pipeline_mode<synchronous>, transform_indices = @transform_12, window_bounds = array<i64: 128, 128>}, {pipeline_mode = #tpu.pipeline_mode<synchronous>, transform_indices = @transform_13, window_bounds = array<i64: 1, 128>}, {transform_indices = @transform_14, window_bounds = array<i64: 2, 8, 128>}]} {
    %c0 = arith.constant 0 : index
    %c0_0 = arith.constant 0 : index
    %c0_1 = arith.constant 0 : index
    %0 = vector.load %arg1[%c0, %c0_0, %c0_1] : memref<2x3x32xf32, #tpu.memory_space<vmem>>, vector<2x3x32xf32>
    %1 = vector.shape_cast %0 : vector<2x3x32xf32> to vector<6x32xf32>
    %2 = arith.truncf %1 : vector<6x32xf32> to vector<6x32xbf16>
    %c0_2 = arith.constant 0 : index
    %c0_3 = arith.constant 0 : index
    %3 = vector.load %arg3[%c0_2, %c0_3] : memref<32x64xbf16, #tpu.memory_space<vmem>>, vector<32x64xbf16>
    %cst = arith.constant dense<0.000000e+00> : vector<6x64xf32>
    %4 = tpu.matmul %2, %3, %cst {dimension_numbers = #tpu.dot_dimension_numbers<[1], [0], [0], [1], [0, 0, 1, 1], [], []>} : vector<6x32xbf16>, vector<32x64xbf16>, vector<6x64xf32> -> vector<6x64xf32>
    %c0_4 = arith.constant 0 : index
    %c0_5 = arith.constant 0 : index
    %5 = vector.load %arg4[%c0_4, %c0_5] : memref<1x64xf32, #tpu.memory_space<vmem>>, vector<1x64xf32>
    %6 = vector.broadcast %5 : vector<1x64xf32> to vector<6x64xf32>
    %7 = arith.addf %4, %6 : vector<6x64xf32>
    %8 = arith.truncf %7 : vector<6x64xf32> to vector<6x64xbf16>
    %c0_6 = arith.constant 0 : index
    %c0_7 = arith.constant 0 : index
    %9 = vector.load %arg5[%c0_6, %c0_7] : memref<64x128xbf16, #tpu.memory_space<vmem>>, vector<64x128xbf16>
    %cst_8 = arith.constant dense<0.000000e+00> : vector<6x128xf32>
    %10 = tpu.matmul %8, %9, %cst_8 {dimension_numbers = #tpu.dot_dimension_numbers<[1], [0], [0], [1], [0, 0, 1, 1], [], []>} : vector<6x64xbf16>, vector<64x128xbf16>, vector<6x128xf32> -> vector<6x128xf32>
    %c0_9 = arith.constant 0 : index
    %c0_10 = arith.constant 0 : index
    %11 = vector.load %arg2[%c0_9, %c0_10] : memref<8x64xbf16, #tpu.memory_space<vmem>>, vector<8x64xbf16>
    %c0_11 = arith.constant 0 : index
    %c0_12 = arith.constant 0 : index
    %12 = vector.load %arg5[%c0_11, %c0_12] : memref<64x128xbf16, #tpu.memory_space<vmem>>, vector<64x128xbf16>
    %cst_13 = arith.constant dense<0.000000e+00> : vector<8x128xf32>
    %13 = tpu.matmul %11, %12, %cst_13 {dimension_numbers = #tpu.dot_dimension_numbers<[1], [0], [0], [1], [0, 0, 1, 1], [], []>} : vector<8x64xbf16>, vector<64x128xbf16>, vector<8x128xf32> -> vector<8x128xf32>
    %14 = vector.shape_cast %10 : vector<6x128xf32> to vector<6x1x128xf32>
    %15 = vector.shape_cast %13 : vector<8x128xf32> to vector<1x8x128xf32>
    %16 = vector.broadcast %14 : vector<6x1x128xf32> to vector<6x8x128xf32>
    %17 = vector.broadcast %15 : vector<1x8x128xf32> to vector<6x8x128xf32>
    %18 = arith.addf %16, %17 : vector<6x8x128xf32>
    %c0_14 = arith.constant 0 : index
    %c0_15 = arith.constant 0 : index
    %19 = vector.load %arg6[%c0_14, %c0_15] : memref<1x128xf32, #tpu.memory_space<vmem>>, vector<1x128xf32>
    %20 = vector.shape_cast %19 : vector<1x128xf32> to vector<1x1x128xf32>
    %21 = vector.broadcast %20 : vector<1x1x128xf32> to vector<6x8x128xf32>
    %22 = arith.addf %18, %21 : vector<6x8x128xf32>
    %cst_16 = arith.constant 0.000000e+00 : f32
    %23 = vector.broadcast %cst_16 : f32 to vector<6x8x128xf32>
    %24 = arith.maximumf %22, %23 : vector<6x8x128xf32>
    %25 = vector.shape_cast %24 : vector<6x8x128xf32> to vector<48x128xf32>
    %26 = arith.truncf %25 : vector<48x128xf32> to vector<48x128xbf16>
    %c0_17 = arith.constant 0 : index
    %c0_18 = arith.constant 0 : index
    %27 = vector.load %arg7[%c0_17, %c0_18] : memref<128x128xbf16, #tpu.memory_space<vmem>>, vector<128x128xbf16>
    %cst_19 = arith.constant dense<0.000000e+00> : vector<48x128xf32>
    %28 = tpu.matmul %26, %27, %cst_19 {dimension_numbers = #tpu.dot_dimension_numbers<[1], [0], [0], [1], [0, 0, 1, 1], [], []>} : vector<48x128xbf16>, vector<128x128xbf16>, vector<48x128xf32> -> vector<48x128xf32>
    %c0_20 = arith.constant 0 : index
    %c0_21 = arith.constant 0 : index
    %29 = vector.load %arg8[%c0_20, %c0_21] : memref<1x128xf32, #tpu.memory_space<vmem>>, vector<1x128xf32>
    %30 = vector.broadcast %29 : vector<1x128xf32> to vector<48x128xf32>
    %31 = arith.addf %28, %30 : vector<48x128xf32>
    %cst_22 = arith.constant 0.000000e+00 : f32
    %32 = vector.broadcast %cst_22 : f32 to vector<48x128xf32>
    %33 = arith.maximumf %31, %32 : vector<48x128xf32>
    %34 = arith.truncf %33 : vector<48x128xf32> to vector<48x128xbf16>
    %c0_23 = arith.constant 0 : index
    %c0_24 = arith.constant 0 : index
    %35 = vector.load %arg9[%c0_23, %c0_24] : memref<128x128xbf16, #tpu.memory_space<vmem>>, vector<128x128xbf16>
    %cst_25 = arith.constant dense<0.000000e+00> : vector<48x128xf32>
    %36 = tpu.matmul %34, %35, %cst_25 {dimension_numbers = #tpu.dot_dimension_numbers<[1], [0], [0], [1], [0, 0, 1, 1], [], []>} : vector<48x128xbf16>, vector<128x128xbf16>, vector<48x128xf32> -> vector<48x128xf32>
    %c0_26 = arith.constant 0 : index
    %c0_27 = arith.constant 0 : index
    %37 = vector.load %arg10[%c0_26, %c0_27] : memref<1x128xf32, #tpu.memory_space<vmem>>, vector<1x128xf32>
    %38 = vector.broadcast %37 : vector<1x128xf32> to vector<48x128xf32>
    %39 = arith.addf %36, %38 : vector<48x128xf32>
    %cst_28 = arith.constant 0.000000e+00 : f32
    %40 = vector.broadcast %cst_28 : f32 to vector<48x128xf32>
    %41 = arith.maximumf %39, %40 : vector<48x128xf32>
    %42 = arith.truncf %41 : vector<48x128xf32> to vector<48x128xbf16>
    %c0_29 = arith.constant 0 : index
    %c0_30 = arith.constant 0 : index
    %43 = vector.load %arg11[%c0_29, %c0_30] : memref<128x128xbf16, #tpu.memory_space<vmem>>, vector<128x128xbf16>
    %cst_31 = arith.constant dense<0.000000e+00> : vector<48x128xf32>
    %44 = tpu.matmul %42, %43, %cst_31 {dimension_numbers = #tpu.dot_dimension_numbers<[1], [0], [0], [1], [0, 0, 1, 1], [], []>} : vector<48x128xbf16>, vector<128x128xbf16>, vector<48x128xf32> -> vector<48x128xf32>
    %c0_32 = arith.constant 0 : index
    %c0_33 = arith.constant 0 : index
    %45 = vector.load %arg12[%c0_32, %c0_33] : memref<1x128xf32, #tpu.memory_space<vmem>>, vector<1x128xf32>
    %46 = vector.broadcast %45 : vector<1x128xf32> to vector<48x128xf32>
    %47 = arith.addf %44, %46 : vector<48x128xf32>
    %c0_34 = arith.constant 0 : index
    %c0_35 = arith.constant 0 : index
    %48 = vector.load %arg13[%c0_34, %c0_35] : memref<128x128xbf16, #tpu.memory_space<vmem>>, vector<128x128xbf16>
    %cst_36 = arith.constant dense<0.000000e+00> : vector<48x128xf32>
    %49 = tpu.matmul %42, %48, %cst_36 {dimension_numbers = #tpu.dot_dimension_numbers<[1], [0], [0], [1], [0, 0, 1, 1], [], []>} : vector<48x128xbf16>, vector<128x128xbf16>, vector<48x128xf32> -> vector<48x128xf32>
    %c0_37 = arith.constant 0 : index
    %c0_38 = arith.constant 0 : index
    %50 = vector.load %arg14[%c0_37, %c0_38] : memref<1x128xf32, #tpu.memory_space<vmem>>, vector<1x128xf32>
    %51 = vector.broadcast %50 : vector<1x128xf32> to vector<48x128xf32>
    %52 = arith.addf %49, %51 : vector<48x128xf32>
    %53 = vector.shape_cast %47 : vector<48x128xf32> to vector<2x3x8x128xf32>
    %54 = vector.shape_cast %52 : vector<48x128xf32> to vector<2x3x8x128xf32>
    %cst_39 = arith.constant dense<0xFF800000> : vector<2x8x128xf32>
    %55 = vector.multi_reduction <maximumf>, %54, %cst_39 [1] : vector<2x3x8x128xf32> to vector<2x8x128xf32>
    %56 = vector.shape_cast %55 : vector<2x8x128xf32> to vector<2x1x8x128xf32>
    %57 = vector.broadcast %56 : vector<2x1x8x128xf32> to vector<2x3x8x128xf32>
    %58 = arith.subf %54, %57 : vector<2x3x8x128xf32>
    %59 = math.exp %58 : vector<2x3x8x128xf32>
    %cst_40 = arith.constant dense<0.000000e+00> : vector<2x8x128xf32>
    %60 = vector.multi_reduction <add>, %59, %cst_40 [1] : vector<2x3x8x128xf32> to vector<2x8x128xf32>
    %61 = vector.shape_cast %60 : vector<2x8x128xf32> to vector<2x1x8x128xf32>
    %62 = tpu.reciprocal %61 {approx = true} : vector<2x1x8x128xf32> -> vector<2x1x8x128xf32>
    %63 = vector.broadcast %62 : vector<2x1x8x128xf32> to vector<2x3x8x128xf32>
    %64 = arith.mulf %59, %63 : vector<2x3x8x128xf32>
    %65 = arith.mulf %53, %64 : vector<2x3x8x128xf32>
    %cst_41 = arith.constant dense<0.000000e+00> : vector<2x8x128xf32>
    %66 = vector.multi_reduction <add>, %65, %cst_41 [1] : vector<2x3x8x128xf32> to vector<2x8x128xf32>
    %67 = tpu.iota {dimensions = array<i32: 2>} : vector<2x8x128xi32>
    %cst_42 = arith.constant 0.000000e+00 : f32
    %68 = vector.broadcast %cst_42 : f32 to vector<2x8x128xf32>
    %c48_i32 = arith.constant 48 : i32
    %69 = vector.broadcast %c48_i32 : i32 to vector<2x8x128xi32>
    %70 = arith.cmpi eq, %67, %69 : vector<2x8x128xi32>
    %71 = vector.extract_strided_slice %64 {offsets = [0, 0, 0, 0], sizes = [2, 1, 8, 128], strides = [1, 1, 1, 1]} : vector<2x3x8x128xf32> to vector<2x1x8x128xf32>
    %72 = vector.shape_cast %71 : vector<2x1x8x128xf32> to vector<2x8x128xf32>
    %cst_43 = arith.constant 0.000000e+00 : f32
    %73 = vector.broadcast %cst_43 : f32 to vector<2x8x128xf32>
    %74 = arith.select %70, %72, %73 : vector<2x8x128xi1>, vector<2x8x128xf32>
    %75 = arith.addf %68, %74 : vector<2x8x128xf32>
    %c49_i32 = arith.constant 49 : i32
    %76 = vector.broadcast %c49_i32 : i32 to vector<2x8x128xi32>
    %77 = arith.cmpi eq, %67, %76 : vector<2x8x128xi32>
    %78 = vector.extract_strided_slice %64 {offsets = [0, 1, 0, 0], sizes = [2, 1, 8, 128], strides = [1, 1, 1, 1]} : vector<2x3x8x128xf32> to vector<2x1x8x128xf32>
    %79 = vector.shape_cast %78 : vector<2x1x8x128xf32> to vector<2x8x128xf32>
    %cst_44 = arith.constant 0.000000e+00 : f32
    %80 = vector.broadcast %cst_44 : f32 to vector<2x8x128xf32>
    %81 = arith.select %77, %79, %80 : vector<2x8x128xi1>, vector<2x8x128xf32>
    %82 = arith.addf %75, %81 : vector<2x8x128xf32>
    %c50_i32 = arith.constant 50 : i32
    %83 = vector.broadcast %c50_i32 : i32 to vector<2x8x128xi32>
    %84 = arith.cmpi eq, %67, %83 : vector<2x8x128xi32>
    %85 = vector.extract_strided_slice %64 {offsets = [0, 2, 0, 0], sizes = [2, 1, 8, 128], strides = [1, 1, 1, 1]} : vector<2x3x8x128xf32> to vector<2x1x8x128xf32>
    %86 = vector.shape_cast %85 : vector<2x1x8x128xf32> to vector<2x8x128xf32>
    %cst_45 = arith.constant 0.000000e+00 : f32
    %87 = vector.broadcast %cst_45 : f32 to vector<2x8x128xf32>
    %88 = arith.select %84, %86, %87 : vector<2x8x128xi1>, vector<2x8x128xf32>
    %89 = arith.addf %82, %88 : vector<2x8x128xf32>
    %90 = arith.addf %66, %89 : vector<2x8x128xf32>
    %c0_46 = arith.constant 0 : index
    %c0_47 = arith.constant 0 : index
    %c0_48 = arith.constant 0 : index
    %91 = vector.load %arg15[%c0_46, %c0_47, %c0_48] : memref<2x8x128xf32, #tpu.memory_space<vmem>>, vector<2x8x128xf32>
    tpu.vector_store %arg15[%c0_46, %c0_47, %c0_48], %90 {strides = array<i32>} : memref<2x8x128xf32, #tpu.memory_space<vmem>>, vector<2x8x128xf32>,
    return
  }
  func.func @transform_0(%arg0: i32) -> (i32, i32, i32) {
    %c0_i32 = arith.constant 0 : i32
    %c0_i32_0 = arith.constant 0 : i32
    %c0_i32_1 = arith.constant 0 : i32
    return %arg0, %c0_i32, %c0_i32_0 : i32, i32, i32
  }
  func.func @transform_1(%arg0: i32) -> (i32, i32) {
    %c0_i32 = arith.constant 0 : i32
    %c0_i32_0 = arith.constant 0 : i32
    %c0_i32_1 = arith.constant 0 : i32
    return %c0_i32, %c0_i32_0 : i32, i32
  }
  func.func @transform_2(%arg0: i32) -> (i32, i32) {
    %c0_i32 = arith.constant 0 : i32
    %c0_i32_0 = arith.constant 0 : i32
    %c0_i32_1 = arith.constant 0 : i32
    return %c0_i32, %c0_i32_0 : i32, i32
  }
  func.func @transform_3(%arg0: i32) -> (i32, i32) {
    %c0_i32 = arith.constant 0 : i32
    %c0_i32_0 = arith.constant 0 : i32
    %c0_i32_1 = arith.constant 0 : i32
    return %c0_i32, %c0_i32_0 : i32, i32
  }
  func.func @transform_4(%arg0: i32) -> (i32, i32) {
    %c0_i32 = arith.constant 0 : i32
    %c0_i32_0 = arith.constant 0 : i32
    %c0_i32_1 = arith.constant 0 : i32
    return %c0_i32, %c0_i32_0 : i32, i32
  }
  func.func @transform_5(%arg0: i32) -> (i32, i32) {
    %c0_i32 = arith.constant 0 : i32
    %c0_i32_0 = arith.constant 0 : i32
    %c0_i32_1 = arith.constant 0 : i32
    return %c0_i32, %c0_i32_0 : i32, i32
  }
  func.func @transform_6(%arg0: i32) -> (i32, i32) {
    %c0_i32 = arith.constant 0 : i32
    %c0_i32_0 = arith.constant 0 : i32
    %c0_i32_1 = arith.constant 0 : i32
    return %c0_i32, %c0_i32_0 : i32, i32
  }
  func.func @transform_7(%arg0: i32) -> (i32, i32) {
    %c0_i32 = arith.constant 0 : i32
    %c0_i32_0 = arith.constant 0 : i32
    %c0_i32_1 = arith.constant 0 : i32
    return %c0_i32, %c0_i32_0 : i32, i32
  }
  func.func @transform_8(%arg0: i32) -> (i32, i32) {
    %c0_i32 = arith.constant 0 : i32
    %c0_i32_0 = arith.constant 0 : i32
    %c0_i32_1 = arith.constant 0 : i32
    return %c0_i32, %c0_i32_0 : i32, i32
  }
  func.func @transform_9(%arg0: i32) -> (i32, i32) {
    %c0_i32 = arith.constant 0 : i32
    %c0_i32_0 = arith.constant 0 : i32
    %c0_i32_1 = arith.constant 0 : i32
    return %c0_i32, %c0_i32_0 : i32, i32
  }
  func.func @transform_10(%arg0: i32) -> (i32, i32) {
    %c0_i32 = arith.constant 0 : i32
    %c0_i32_0 = arith.constant 0 : i32
    %c0_i32_1 = arith.constant 0 : i32
    return %c0_i32, %c0_i32_0 : i32, i32
  }
  func.func @transform_11(%arg0: i32) -> (i32, i32) {
    %c0_i32 = arith.constant 0 : i32
    %c0_i32_0 = arith.constant 0 : i32
    %c0_i32_1 = arith.constant 0 : i32
    return %c0_i32, %c0_i32_0 : i32, i32
  }
  func.func @transform_12(%arg0: i32) -> (i32, i32) {
    %c0_i32 = arith.constant 0 : i32
    %c0_i32_0 = arith.constant 0 : i32
    %c0_i32_1 = arith.constant 0 : i32
    return %c0_i32, %c0_i32_0 : i32, i32
  }
  func.func @transform_13(%arg0: i32) -> (i32, i32) {
    %c0_i32 = arith.constant 0 : i32
    %c0_i32_0 = arith.constant 0 : i32
    %c0_i32_1 = arith.constant 0 : i32
    return %c0_i32, %c0_i32_0 : i32, i32
  }
  func.func @transform_14(%arg0: i32) -> (i32, i32, i32) {
    %c0_i32 = arith.constant 0 : i32
    %c0_i32_0 = arith.constant 0 : i32
    %c0_i32_1 = arith.constant 0 : i32
    return %arg0, %c0_i32, %c0_i32_0 : i32, i32, i32
  }
}

</mosaic_0001>

<llo_original>
// kernel: tpu_custom_call.1
$region0: #{tpu_custom_call.1}
  #allocation0 [shape = 'u32[]', space=smem, size = 0x4, offset = 0x4, fixed_abs, tag = 'smem constant byte address 0x4 - core index']
  #allocation1 [shape = 'u32[144,128]{1,0:T(1,128)}', space=vmem, size = 0x12000, scoped, tag = 'internal scratch']
  %s0 = inlined_call_operand.vmem [shape: f32[2,3,32], index: 0, kind: input, shape index: {}]
  %s1 = inlined_call_operand.vmem [shape: bf16[8,64], index: 1, kind: input, shape index: {}]
  %s2 = inlined_call_operand.vmem [shape: bf16[32,64], index: 2, kind: input, shape index: {}]
  %s3 = inlined_call_operand.vmem [shape: f32[1,64], index: 3, kind: input, shape index: {}]
  %s4 = inlined_call_operand.hbm [shape: bf16[64,128], index: 4, kind: input, shape index: {}]
  %s5 = inlined_call_operand.vmem [shape: f32[1,128], index: 5, kind: input, shape index: {}]
  %s6 = inlined_call_operand.hbm [shape: bf16[128,128], index: 6, kind: input, shape index: {}]
  %s7 = inlined_call_operand.vmem [shape: f32[1,128], index: 7, kind: input, shape index: {}]
  %s8 = inlined_call_operand.hbm [shape: bf16[128,128], index: 8, kind: input, shape index: {}]
  %s9 = inlined_call_operand.vmem [shape: f32[1,128], index: 9, kind: input, shape index: {}]
  %s10 = inlined_call_operand.hbm [shape: bf16[128,128], index: 10, kind: input, shape index: {}]
  %s11 = inlined_call_operand.vmem [shape: f32[1,128], index: 11, kind: input, shape index: {}]
  %s12 = inlined_call_operand.hbm [shape: bf16[128,128], index: 12, kind: input, shape index: {}]
  %s13 = inlined_call_operand.vmem [shape: f32[1,128], index: 13, kind: input, shape index: {}]
  %s14 = inlined_call_operand.hbm [shape: f32[2,8,128], index: 14, kind: output, shape index: {}]
  %s15 = sld [smem:[#allocation0]]
  $region86: #{tpu_custom_call.1} parent=0
    _
  %s17 = ssub.s32 1, %s15
  %s18 = scalar_select 0, %s17, %s15
  $region1: #{tpu_custom_call.1} parent=0
    #allocation2 [shape = 'u8[16384]{0}', space=vmem, size = 0x4000, scoped, tag = 'input window, operand 4, single buffered']
    #allocation3 [shape = 's32[1]{0}', space=sflag, size = 0x4, scoped, tag = 'scoped memory for tpu_custom_call.1']
    #allocation4 [shape = 's32[1]{0}', space=sflag, size = 0x4, scoped, tag = 'scoped memory for tpu_custom_call.1']
    #allocation5 [shape = 'u8[32768]{0}', space=vmem, size = 0x8000, scoped, tag = 'input window, operand 6, single buffered']
    #allocation6 [shape = 's32[1]{0}', space=sflag, size = 0x4, scoped, tag = 'scoped memory for tpu_custom_call.1']
    #allocation7 [shape = 'u8[32768]{0}', space=vmem, size = 0x8000, scoped, tag = 'input window, operand 8, single buffered']
    #allocation8 [shape = 'u8[32768]{0}', space=vmem, size = 0x8000, scoped, tag = 'input window, operand 10, single buffered']
    #allocation9 [shape = 's32[1]{0}', space=sflag, size = 0x4, scoped, tag = 'scoped memory for tpu_custom_call.1']
    #allocation10 [shape = 'u8[32768]{0}', space=vmem, size = 0x8000, scoped, tag = 'input window, operand 12, single buffered']
    #allocation11 [shape = 'u8[8192]{0}', space=vmem, size = 0x2000, scoped, tag = 'output window, operand 0, single buffered']
    %19 = vsyncpa [#allocation3], 0
    %20 = vsyncpa [#allocation6], 0
    %21 = vsyncpa [#allocation9], 0
    %22 = vsyncpa [#allocation4], 0
    // Predicated region
    $region2: #{tpu_custom_call.1} parent=1 // pred_check
      _
    $region3: #{tpu_custom_call.1} parent=1 // pred_check_branch
      %24 = sbr.rel (0) target = $region5
    $region4: #{tpu_custom_call.1} parent=1 // pred_region
      _
    $region5: #{tpu_custom_call.1} parent=1 // pred_fallthru
      _
    // Predicated region
    $region6: #{tpu_custom_call.1} parent=1 // pred_check
      _
    $region7: #{tpu_custom_call.1} parent=1 // pred_check_branch
      %26 = sbr.rel (0) target = $region9
    $region8: #{tpu_custom_call.1} parent=1 // pred_region
      _
    $region9: #{tpu_custom_call.1} parent=1 // pred_fallthru
      _
    // Predicated region
    $region10: #{tpu_custom_call.1} parent=1 // pred_check
      _
    $region11: #{tpu_custom_call.1} parent=1 // pred_check_branch
      %28 = sbr.rel (0) target = $region13
    $region12: #{tpu_custom_call.1} parent=1 // pred_region
      _
    $region13: #{tpu_custom_call.1} parent=1 // pred_fallthru
      _
    // Predicated region
    $region14: #{tpu_custom_call.1} parent=1 // pred_check
      _
    $region15: #{tpu_custom_call.1} parent=1 // pred_check_branch
      %30 = sbr.rel (0) target = $region17
    $region16: #{tpu_custom_call.1} parent=1 // pred_region
      _
    $region17: #{tpu_custom_call.1} parent=1 // pred_fallthru
      _
    // Predicated region
    $region18: #{tpu_custom_call.1} parent=1 // pred_check
      _
    $region19: #{tpu_custom_call.1} parent=1 // pred_check_branch
      %32 = sbr.rel (0) target = $region21
    $region20: #{tpu_custom_call.1} parent=1 // pred_region
      %s34 = ssub.s32 512, 512
      %35 = vsyncadd [#allocation3], %s34
      %s36 = sshll.u32 [#allocation2], 4
      %s37 = int_to_ptr.vmem [resolvable:$true] %s36
      %42 = dma.hbm_to_vmem [thread:$0]  %s4, 512, %s37, [#allocation3], 64, 64, 4
    $region21: #{tpu_custom_call.1} parent=1 // pred_fallthru
      _
    // Predicated region
    $region22: #{tpu_custom_call.1} parent=1 // pred_check
      _
    $region23: #{tpu_custom_call.1} parent=1 // pred_check_branch
      %44 = sbr.rel (0) target = $region25
    $region24: #{tpu_custom_call.1} parent=1 // pred_region
      _
    $region25: #{tpu_custom_call.1} parent=1 // pred_fallthru
      _
    // Predicated region
    $region26: #{tpu_custom_call.1} parent=1 // pred_check
      _
    $region27: #{tpu_custom_call.1} parent=1 // pred_check_branch
      %46 = sbr.rel (0) target = $region29
    $region28: #{tpu_custom_call.1} parent=1 // pred_region
      %s48 = ssub.s32 1024, 1024
      %49 = vsyncadd [#allocation6], %s48
      %s50 = sshll.u32 [#allocation5], 4
      %s51 = int_to_ptr.vmem [resolvable:$true] %s50
      %56 = dma.hbm_to_vmem [thread:$0]  %s6, 1024, %s51, [#allocation6], 64, 64, 4
    $region29: #{tpu_custom_call.1} parent=1 // pred_fallthru
      _
    // Predicated region
    $region30: #{tpu_custom_call.1} parent=1 // pred_check
      _
    $region31: #{tpu_custom_call.1} parent=1 // pred_check_branch
      %58 = sbr.rel (0) target = $region33
    $region32: #{tpu_custom_call.1} parent=1 // pred_region
      _
    $region33: #{tpu_custom_call.1} parent=1 // pred_fallthru
      _
    // Predicated region
    $region34: #{tpu_custom_call.1} parent=1 // pred_check
      _
    $region35: #{tpu_custom_call.1} parent=1 // pred_check_branch
      %60 = sbr.rel (0) target = $region37
    $region36: #{tpu_custom_call.1} parent=1 // pred_region
      %s62 = ssub.s32 1024, 1024
      %63 = vsyncadd [#allocation6], %s62
      %s64 = sshll.u32 [#allocation7], 4
      %s65 = int_to_ptr.vmem [resolvable:$true] %s64
      %70 = dma.hbm_to_vmem [thread:$0]  %s8, 1024, %s65, [#allocation6], 64, 64, 4
    $region37: #{tpu_custom_call.1} parent=1 // pred_fallthru
      _
    // Predicated region
    $region38: #{tpu_custom_call.1} parent=1 // pred_check
      _
    $region39: #{tpu_custom_call.1} parent=1 // pred_check_branch
      %72 = sbr.rel (0) target = $region41
    $region40: #{tpu_custom_call.1} parent=1 // pred_region
      _
    $region41: #{tpu_custom_call.1} parent=1 // pred_fallthru
      _
    // Predicated region
    $region42: #{tpu_custom_call.1} parent=1 // pred_check
      _
    $region43: #{tpu_custom_call.1} parent=1 // pred_check_branch
      %74 = sbr.rel (0) target = $region45
    $region44: #{tpu_custom_call.1} parent=1 // pred_region
      %s76 = ssub.s32 1024, 1024
      %77 = vsyncadd [#allocation9], %s76
      %s78 = sshll.u32 [#allocation8], 4
      %s79 = int_to_ptr.vmem [resolvable:$true] %s78
      %84 = dma.hbm_to_vmem [thread:$0]  %s10, 1024, %s79, [#allocation9], 64, 64, 4
    $region45: #{tpu_custom_call.1} parent=1 // pred_fallthru
      _
    // Predicated region
    $region46: #{tpu_custom_call.1} parent=1 // pred_check
      _
    $region47: #{tpu_custom_call.1} parent=1 // pred_check_branch
      %86 = sbr.rel (0) target = $region49
    $region48: #{tpu_custom_call.1} parent=1 // pred_region
      _
    $region49: #{tpu_custom_call.1} parent=1 // pred_fallthru
      _
    // Predicated region
    $region50: #{tpu_custom_call.1} parent=1 // pred_check
      _
    $region51: #{tpu_custom_call.1} parent=1 // pred_check_branch
      %88 = sbr.rel (0) target = $region53
    $region52: #{tpu_custom_call.1} parent=1 // pred_region
      %s90 = ssub.s32 1024, 1024
      %91 = vsyncadd [#allocation9], %s90
      %s92 = sshll.u32 [#allocation10], 4
      %s93 = int_to_ptr.vmem [resolvable:$true] %s92
      %98 = dma.hbm_to_vmem [thread:$0]  %s12, 1024, %s93, [#allocation9], 64, 64, 4
    $region53: #{tpu_custom_call.1} parent=1 // pred_fallthru
      _
    // Predicated region
    $region54: #{tpu_custom_call.1} parent=1 // pred_check
      _
    $region55: #{tpu_custom_call.1} parent=1 // pred_check_branch
      %100 = sbr.rel (0) target = $region57
    $region56: #{tpu_custom_call.1} parent=1 // pred_region
      _
    $region57: #{tpu_custom_call.1} parent=1 // pred_fallthru
      _
    // Predicated region
    $region58: #{tpu_custom_call.1} parent=1 // pred_check
      _
    $region59: #{tpu_custom_call.1} parent=1 // pred_check_branch
      %102 = sbr.rel (0) target = $region61
    $region60: #{tpu_custom_call.1} parent=1 // pred_region
      %103 = dma.done [#allocation3], 512
    $region61: #{tpu_custom_call.1} parent=1 // pred_fallthru
      _
    // Predicated region
    $region62: #{tpu_custom_call.1} parent=1 // pred_check
      _
    $region63: #{tpu_custom_call.1} parent=1 // pred_check_branch
      %105 = sbr.rel (0) target = $region65
    $region64: #{tpu_custom_call.1} parent=1 // pred_region
      %106 = dma.done [#allocation6], 1024
    $region65: #{tpu_custom_call.1} parent=1 // pred_fallthru
      _
    // Predicated region
    $region66: #{tpu_custom_call.1} parent=1 // pred_check
      _
    $region67: #{tpu_custom_call.1} parent=1 // pred_check_branch
      %108 = sbr.rel (0) target = $region69
    $region68: #{tpu_custom_call.1} parent=1 // pred_region
      %109 = dma.done [#allocation6], 1024
    $region69: #{tpu_custom_call.1} parent=1 // pred_fallthru
      _
    // Predicated region
    $region70: #{tpu_custom_call.1} parent=1 // pred_check
      _
    $region71: #{tpu_custom_call.1} parent=1 // pred_check_branch
      %111 = sbr.rel (0) target = $region73
    $region72: #{tpu_custom_call.1} parent=1 // pred_region
      %112 = dma.done [#allocation9], 1024
    $region73: #{tpu_custom_call.1} parent=1 // pred_fallthru
      _
    // Predicated region
    $region74: #{tpu_custom_call.1} parent=1 // pred_check
      _
    $region75: #{tpu_custom_call.1} parent=1 // pred_check_branch
      %114 = sbr.rel (0) target = $region77
    $region76: #{tpu_custom_call.1} parent=1 // pred_region
      %115 = dma.done [#allocation9], 1024
    $region77: #{tpu_custom_call.1} parent=1 // pred_fallthru
      _
    %v117 = vld [vmem:[%s0] sm:$0x7]
    %v118 = vld [vmem:[%s0 + $0x4] sm:$0x7]
    %v122 = vunpack.c.l.s4 1966171168
    %v123 = vunpack.c.0.s8 %v122
    %v124 = vlaneseq
    %v125 = vshrl.u32 %v124, 7
    %v126 = vsub.s32 %v123, %v125
    %v127 = vrot.slane %v117, %v126
    %v128 = vcombine.high %v127, %v127
    %v130 = vunpack.c.l.s4 1966171168
    %v131 = vunpack.c.0.s8 %v130
    %v132 = vlaneseq
    %v133 = vshrl.u32 %v132, 7
    %v134 = vsub.s32 %v131, %v133
    %v135 = vrot.slane %v127, %v134
    %v137 = vunpack.c.l.s4 1966171168
    %v138 = vunpack.c.0.s8 %v137
    %v139 = vlaneseq
    %v140 = vshrl.u32 %v139, 7
    %v141 = vsub.s32 %v138, %v140
    %v142 = vrot.slane %v128, %v141
    %v143 = vcombine.high %v135, %v135
    %v145 = vunpack.c.l.s4 1966171168
    %v146 = vunpack.c.0.s8 %v145
    %v147 = vlaneseq
    %v148 = vshrl.u32 %v147, 7
    %v149 = vsub.s32 %v146, %v148
    %v150 = vrot.slane %v118, %v149
    %v151 = vcombine.high %v150, %v150
    %v153 = vunpack.c.l.s4 1966171168
    %v154 = vunpack.c.0.s8 %v153
    %v155 = vlaneseq
    %v156 = vshrl.u32 %v155, 7
    %v157 = vsub.s32 %v154, %v156
    %v158 = vrot.slane %v150, %v157
    %v160 = vunpack.c.l.s4 1966171168
    %v161 = vunpack.c.0.s8 %v160
    %v162 = vlaneseq
    %v163 = vshrl.u32 %v162, 7
    %v164 = vsub.s32 %v161, %v163
    %v165 = vrot.slane %v151, %v164
    %v166 = vcombine.high %v158, %v158
    %v167 = vcombine.low %v135, %v142
    %v168 = vcombine.low %v143, %v158
    %v169 = vcombine.low %v165, %v166
    %v171 = vunpack.c.l.s4 1966171168
    %v172 = vunpack.c.0.s8 %v171
    %v173 = vlaneseq
    %v174 = vshrl.u32 %v173, 7
    %v175 = vsub.s32 %v172, %v174
    %v176 = vrot.slane %v167, %v175
    %v178 = vunpack.c.l.s4 1966171168
    %v179 = vunpack.c.0.s8 %v178
    %v180 = vlaneseq
    %v181 = vshrl.u32 %v180, 7
    %v182 = vsub.s32 %v179, %v181
    %v183 = vrot.slane %v168, %v182
    %v185 = vunpack.c.l.s4 1966171168
    %v186 = vunpack.c.0.s8 %v185
    %v187 = vlaneseq
    %v188 = vshrl.u32 %v187, 7
    %v189 = vsub.s32 %v186, %v188
    %v190 = vrot.slane %v169, %v189
    %v191 = vcombine.low %v176, %v183
    %v193 = vunpack.c.l.s4 1966171168
    %v194 = vunpack.c.0.s8 %v193
    %v195 = vlaneseq
    %v196 = vshrl.u32 %v195, 7
    %v197 = vsub.s32 %v194, %v196
    %v198 = vrot.slane %v191, %v197
    %v200 = vunpack.c.l.s4 1966171168
    %v201 = vunpack.c.0.s8 %v200
    %v202 = vlaneseq
    %v203 = vshrl.u32 %v202, 7
    %v204 = vsub.s32 %v201, %v203
    %v205 = vrot.slane %v190, %v204
    %v206 = vcombine.low %v198, %v205
    %v208 = vpack.c.bf16 %v206, %v206
    %v209 = vld [vmem:[%s2] sm:$0xf]
    %v210 = vld [vmem:[%s2 + $0x4] sm:$0xf]
    %v211 = vld [vmem:[%s2 + $0x8] sm:$0xf]
    %v212 = vld [vmem:[%s2 + $0xc] sm:$0xf]
    %v213 = vld [vmem:[%s3] sm:$0x1]
    %v215 = vlaneseq
    %v216 = vshrl.u32 %v215, 7
    %v217 = vsub.s32 0, %v216
    %v218 = vrot.slane %v213, %v217
    %v224 = vunpack.c.l.b16 %v209
    %v225 = vunpack.c.l.b16 %v210
    %v226 = vunpack.c.l.b16 %v211
    %v227 = vunpack.c.l.b16 %v212
    %v228 = vpack.c.b16 %v225, %v224
    %v229 = vpack.c.b16 %v227, %v226
    %vm232 = vcmask 261120
    %v234 = vsel %vm232, %v208, 0
    %236 = vmatprep.subr.bf16.mxu0 0
    %237 = vmatpush1.bf16.msra.mxu0 %v228
    %238 = vmatprep.subr.bf16.mxu0 0
    %239 = vmatpush1.bf16.msra.mxu0 %v229
    %240 = vmatprep.subr.bf16.mxu0 0
    %241 = vmatpush1.bf16.msra.mxu0 0
    %242 = vmatprep.subr.bf16.mxu0 0
    %243 = vmatpush1.bf16.msra.mxu0 0
    %244 = vmatprep.subr.bf16.mxu0 0
    %245 = vmatpush1.bf16.msra.mxu0 0
    %246 = vmatprep.subr.bf16.mxu0 0
    %247 = vmatpush1.bf16.msra.mxu0 0
    %248 = vmatprep.subr.bf16.mxu0 0
    %249 = vmatpush1.bf16.msra.mxu0 0
    %250 = vmatprep.subr.bf16.mxu0 0
    %251 = vmatpush1.bf16.msra.mxu0 0
    %252 = vmatprep.subr.bf16.mxu0 0
    %253 = vmatpush1.bf16.msra.mxu0 0
    %254 = vmatprep.subr.bf16.mxu0 0
    %255 = vmatpush1.bf16.msra.mxu0 0
    %256 = vmatprep.subr.bf16.mxu0 0
    %257 = vmatpush1.bf16.msra.mxu0 0
    %258 = vmatprep.subr.bf16.mxu0 0
    %259 = vmatpush1.bf16.msra.mxu0 0
    %260 = vmatprep.subr.bf16.mxu0 0
    %261 = vmatpush1.bf16.msra.mxu0 0
    %262 = vmatprep.subr.bf16.mxu0 0
    %263 = vmatpush1.bf16.msra.mxu0 0
    %264 = vmatprep.subr.bf16.mxu0 0
    %265 = vmatpush1.bf16.msra.mxu0 0
    %266 = vmatprep.subr.bf16.mxu0 0
    %267 = vmatpush1.bf16.msra.mxu0 0
    %268 = vmatprep.mubr.bf16.mxu0 0
    %269 = vmatmul.mubr.bf16.gmra.mrb[0].mxu0 %v234
    %v270 = vpop.f32.mrb[0].mxu0
    %v271 = vadd.f32 %v218, %v270
    %v272 = vpop.f32.mrb[0].mxu0
    %v273 = vpop.f32.mrb[0].mxu0
    %v274 = vpop.f32.mrb[0].mxu0
    %275 = vdwg.mxu0
    %v276 = vpack.c.bf16 %v271, %v271
    %v277 = vld [vmem:[#allocation2] sm:$0xf]
    %v278 = vld [vmem:[#allocation2 + $0x4] sm:$0xf]
    %v279 = vld [vmem:[#allocation2 + $0x8] sm:$0xf]
    %v280 = vld [vmem:[#allocation2 + $0xc] sm:$0xf]
    %v281 = vld [vmem:[#allocation2 + $0x10] sm:$0xf]
    %v282 = vld [vmem:[#allocation2 + $0x14] sm:$0xf]
    %v283 = vld [vmem:[#allocation2 + $0x18] sm:$0xf]
    %v284 = vld [vmem:[#allocation2 + $0x1c] sm:$0xf]
    %v293 = vunpack.c.l.b16 %v277
    %v294 = vunpack.c.l.b16 %v278
    %v295 = vunpack.c.l.b16 %v279
    %v296 = vunpack.c.l.b16 %v280
    %v297 = vunpack.c.l.b16 %v281
    %v298 = vunpack.c.l.b16 %v282
    %v299 = vunpack.c.l.b16 %v283
    %v300 = vunpack.c.l.b16 %v284
    %v301 = vpack.c.b16 %v294, %v293
    %v302 = vpack.c.b16 %v296, %v295
    %v303 = vpack.c.b16 %v298, %v297
    %v304 = vpack.c.b16 %v300, %v299
    %vm309 = vcmask 523264
    %v311 = vsel %vm309, %v276, 0
    %313 = vmatprep.subr.bf16.mxu0 0
    %314 = vmatpush1.bf16.msra.mxu0 %v301
    %315 = vmatprep.subr.bf16.mxu0 0
    %316 = vmatpush1.bf16.msra.mxu0 %v302
    %317 = vmatprep.subr.bf16.mxu0 0
    %318 = vmatpush1.bf16.msra.mxu0 %v303
    %319 = vmatprep.subr.bf16.mxu0 0
    %320 = vmatpush1.bf16.msra.mxu0 %v304
    %321 = vmatprep.subr.bf16.mxu0 0
    %322 = vmatpush1.bf16.msra.mxu0 0
    %323 = vmatprep.subr.bf16.mxu0 0
    %324 = vmatpush1.bf16.msra.mxu0 0
    %325 = vmatprep.subr.bf16.mxu0 0
    %326 = vmatpush1.bf16.msra.mxu0 0
    %327 = vmatprep.subr.bf16.mxu0 0
    %328 = vmatpush1.bf16.msra.mxu0 0
    %329 = vmatprep.subr.bf16.mxu0 0
    %330 = vmatpush1.bf16.msra.mxu0 0
    %331 = vmatprep.subr.bf16.mxu0 0
    %332 = vmatpush1.bf16.msra.mxu0 0
    %333 = vmatprep.subr.bf16.mxu0 0
    %334 = vmatpush1.bf16.msra.mxu0 0
    %335 = vmatprep.subr.bf16.mxu0 0
    %336 = vmatpush1.bf16.msra.mxu0 0
    %337 = vmatprep.subr.bf16.mxu0 0
    %338 = vmatpush1.bf16.msra.mxu0 0
    %339 = vmatprep.subr.bf16.mxu0 0
    %340 = vmatpush1.bf16.msra.mxu0 0
    %341 = vmatprep.subr.bf16.mxu0 0
    %342 = vmatpush1.bf16.msra.mxu0 0
    %343 = vmatprep.subr.bf16.mxu0 0
    %344 = vmatpush1.bf16.msra.mxu0 0
    %345 = vmatprep.mubr.bf16.mxu0 0
    %346 = vmatmul.mubr.bf16.gmra.mrb[0].mxu0 %v311
    %v347 = vpop.f32.mrb[0].mxu0
    %v348 = vadd.f32 0.0, %v347
    %v349 = vpop.f32.mrb[0].mxu0
    %v350 = vpop.f32.mrb[0].mxu0
    %v351 = vpop.f32.mrb[0].mxu0
    %352 = vdwg.mxu0
    %v353 = vld [vmem:[%s1] sm:$0xf]
    %v355 = vsel %vm309, %v353, 0
    %357 = vmatprep.subr.bf16.mxu0 0
    %358 = vmatpush1.bf16.msra.mxu0 %v301
    %359 = vmatprep.subr.bf16.mxu0 0
    %360 = vmatpush1.bf16.msra.mxu0 %v302
    %361 = vmatprep.subr.bf16.mxu0 0
    %362 = vmatpush1.bf16.msra.mxu0 %v303
    %363 = vmatprep.subr.bf16.mxu0 0
    %364 = vmatpush1.bf16.msra.mxu0 %v304
    %365 = vmatprep.subr.bf16.mxu0 0
    %366 = vmatpush1.bf16.msra.mxu0 0
    %367 = vmatprep.subr.bf16.mxu0 0
    %368 = vmatpush1.bf16.msra.mxu0 0
    %369 = vmatprep.subr.bf16.mxu0 0
    %370 = vmatpush1.bf16.msra.mxu0 0
    %371 = vmatprep.subr.bf16.mxu0 0
    %372 = vmatpush1.bf16.msra.mxu0 0
    %373 = vmatprep.subr.bf16.mxu0 0
    %374 = vmatpush1.bf16.msra.mxu0 0
    %375 = vmatprep.subr.bf16.mxu0 0
    %376 = vmatpush1.bf16.msra.mxu0 0
    %377 = vmatprep.subr.bf16.mxu0 0
    %378 = vmatpush1.bf16.msra.mxu0 0
    %379 = vmatprep.subr.bf16.mxu0 0
    %380 = vmatpush1.bf16.msra.mxu0 0
    %381 = vmatprep.subr.bf16.mxu0 0
    %382 = vmatpush1.bf16.msra.mxu0 0
    %383 = vmatprep.subr.bf16.mxu0 0
    %384 = vmatpush1.bf16.msra.mxu0 0
    %385 = vmatprep.subr.bf16.mxu0 0
    %386 = vmatpush1.bf16.msra.mxu0 0
    %387 = vmatprep.subr.bf16.mxu0 0
    %388 = vmatpush1.bf16.msra.mxu0 0
    %389 = vmatprep.mubr.bf16.mxu0 0
    %390 = vmatmul.mubr.bf16.gmra.mrb[0].mxu0 %v355
    %v391 = vpop.f32.mrb[0].mxu0
    %v392 = vadd.f32 0.0, %v391
    %v393 = vpop.f32.mrb[0].mxu0
    %v394 = vpop.f32.mrb[0].mxu0
    %v395 = vpop.f32.mrb[0].mxu0
    %396 = vdwg.mxu0
    %v398 = vcombine.high %v348, %v348
    %v400 = vunpack.c.l.s4 1966171168
    %v401 = vunpack.c.0.s8 %v400
    %v402 = vlaneseq
    %v403 = vshrl.u32 %v402, 7
    %v404 = vsub.s32 %v401, %v403
    %v405 = vrot.slane %v348, %v404
    %v407 = vunpack.c.l.s4 1966171168
    %v408 = vunpack.c.0.s8 %v407
    %v409 = vlaneseq
    %v410 = vshrl.u32 %v409, 7
    %v411 = vsub.s32 %v408, %v410
    %v412 = vrot.slane %v398, %v411
    %v413 = vcombine.high %v405, %v405
    %v414 = vcombine.high %v412, %v412
    %v416 = vunpack.c.l.s4 1966171168
    %v417 = vunpack.c.0.s8 %v416
    %v418 = vlaneseq
    %v419 = vshrl.u32 %v418, 7
    %v420 = vsub.s32 %v417, %v419
    %v421 = vrot.slane %v405, %v420
    %v423 = vunpack.c.l.s4 1966171168
    %v424 = vunpack.c.0.s8 %v423
    %v425 = vlaneseq
    %v426 = vshrl.u32 %v425, 7
    %v427 = vsub.s32 %v424, %v426
    %v428 = vrot.slane %v412, %v427
    %v430 = vunpack.c.l.s4 1966171168
    %v431 = vunpack.c.0.s8 %v430
    %v432 = vlaneseq
    %v433 = vshrl.u32 %v432, 7
    %v434 = vsub.s32 %v431, %v433
    %v435 = vrot.slane %v413, %v434
    %v437 = vunpack.c.l.s4 1966171168
    %v438 = vunpack.c.0.s8 %v437
    %v439 = vlaneseq
    %v440 = vshrl.u32 %v439, 7
    %v441 = vsub.s32 %v438, %v440
    %v442 = vrot.slane %v414, %v441
    %v443 = vcombine.high %v421, %v421
    %v444 = vcombine.high %v435, %v435
    %v445 = vlaneseq
    %v446 = vshrl.u32 %v445, 7
    %v447 = vsub.s32 0, %v446
    %v448 = vrot.slane %v421, %v447
    %v449 = vlaneseq
    %v450 = vshrl.u32 %v449, 7
    %v451 = vsub.s32 0, %v450
    %v452 = vrot.slane %v435, %v451
    %v453 = vlaneseq
    %v454 = vshrl.u32 %v453, 7
    %v455 = vsub.s32 0, %v454
    %v456 = vrot.slane %v443, %v455
    %v457 = vlaneseq
    %v458 = vshrl.u32 %v457, 7
    %v459 = vsub.s32 0, %v458
    %v460 = vrot.slane %v444, %v459
    %v461 = vlaneseq
    %v462 = vshrl.u32 %v461, 7
    %v463 = vsub.s32 0, %v462
    %v464 = vrot.slane %v428, %v463
    %v465 = vlaneseq
    %v466 = vshrl.u32 %v465, 7
    %v467 = vsub.s32 0, %v466
    %v468 = vrot.slane %v442, %v467
    %v475 = vadd.f32 %v448, %v392
    %v476 = vadd.f32 %v452, %v392
    %v477 = vadd.f32 %v456, %v392
    %v478 = vadd.f32 %v460, %v392
    %v479 = vadd.f32 %v464, %v392
    %v480 = vadd.f32 %v468, %v392
    %v481 = vld [vmem:[%s5] sm:$0x1]
    %v483 = vlaneseq
    %v484 = vshrl.u32 %v483, 7
    %v485 = vsub.s32 0, %v484
    %v486 = vrot.slane %v481, %v485
    %v488 = vadd.f32 %v475, %v486
    %v489 = vadd.f32 %v476, %v486
    %v490 = vadd.f32 %v477, %v486
    %v491 = vadd.f32 %v478, %v486
    %v492 = vadd.f32 %v479, %v486
    %v493 = vadd.f32 %v480, %v486
    %v494 = vmax.f32 %v488, 0.0
    %v495 = vmax.f32 %v489, 0.0
    %v496 = vmax.f32 %v490, 0.0
    %v497 = vmax.f32 %v491, 0.0
    %v498 = vmax.f32 %v492, 0.0
    %v499 = vmax.f32 %v493, 0.0
    %v500 = vpack.c.bf16 %v495, %v494
    %v501 = vpack.c.bf16 %v497, %v496
    %v502 = vpack.c.bf16 %v499, %v498
    %v503 = vld [vmem:[#allocation5] sm:$0xf]
    %v504 = vld [vmem:[#allocation5 + $0x4] sm:$0xf]
    %v505 = vld [vmem:[#allocation5 + $0x8] sm:$0xf]
    %v506 = vld [vmem:[#allocation5 + $0xc] sm:$0xf]
    %v507 = vld [vmem:[#allocation5 + $0x10] sm:$0xf]
    %v508 = vld [vmem:[#allocation5 + $0x14] sm:$0xf]
    %v509 = vld [vmem:[#allocation5 + $0x18] sm:$0xf]
    %v510 = vld [vmem:[#allocation5 + $0x1c] sm:$0xf]
    %v511 = vld [vmem:[#allocation5 + $0x20] sm:$0xf]
    %v512 = vld [vmem:[#allocation5 + $0x24] sm:$0xf]
    %v513 = vld [vmem:[#allocation5 + $0x28] sm:$0xf]
    %v514 = vld [vmem:[#allocation5 + $0x2c] sm:$0xf]
    %v515 = vld [vmem:[#allocation5 + $0x30] sm:$0xf]
    %v516 = vld [vmem:[#allocation5 + $0x34] sm:$0xf]
    %v517 = vld [vmem:[#allocation5 + $0x38] sm:$0xf]
    %v518 = vld [vmem:[#allocation5 + $0x3c] sm:$0xf]
    %v519 = vld [vmem:[%s7] sm:$0x1]
    %v521 = vlaneseq
    %v522 = vshrl.u32 %v521, 7
    %v523 = vsub.s32 0, %v522
    %v524 = vrot.slane %v519, %v523
    %v542 = vunpack.c.l.b16 %v503
    %v543 = vunpack.c.l.b16 %v504
    %v544 = vunpack.c.l.b16 %v505
    %v545 = vunpack.c.l.b16 %v506
    %v546 = vunpack.c.l.b16 %v507
    %v547 = vunpack.c.l.b16 %v508
    %v548 = vunpack.c.l.b16 %v509
    %v549 = vunpack.c.l.b16 %v510
    %v550 = vunpack.c.l.b16 %v511
    %v551 = vunpack.c.l.b16 %v512
    %v552 = vunpack.c.l.b16 %v513
    %v553 = vunpack.c.l.b16 %v514
    %v554 = vunpack.c.l.b16 %v515
    %v555 = vunpack.c.l.b16 %v516
    %v556 = vunpack.c.l.b16 %v517
    %v557 = vunpack.c.l.b16 %v518
    %v558 = vpack.c.b16 %v543, %v542
    %v559 = vpack.c.b16 %v545, %v544
    %v560 = vpack.c.b16 %v547, %v546
    %v561 = vpack.c.b16 %v549, %v548
    %v562 = vpack.c.b16 %v551, %v550
    %v563 = vpack.c.b16 %v553, %v552
    %v564 = vpack.c.b16 %v555, %v554
    %v565 = vpack.c.b16 %v557, %v556
    %574 = vmatprep.subr.bf16.mxu0 0
    %575 = vmatpush1.bf16.msra.mxu0 %v558
    %576 = vmatprep.subr.bf16.mxu0 0
    %577 = vmatpush1.bf16.msra.mxu0 %v559
    %578 = vmatprep.subr.bf16.mxu0 0
    %579 = vmatpush1.bf16.msra.mxu0 %v560
    %580 = vmatprep.subr.bf16.mxu0 0
    %581 = vmatpush1.bf16.msra.mxu0 %v561
    %582 = vmatprep.subr.bf16.mxu0 0
    %583 = vmatpush1.bf16.msra.mxu0 %v562
    %584 = vmatprep.subr.bf16.mxu0 0
    %585 = vmatpush1.bf16.msra.mxu0 %v563
    %586 = vmatprep.subr.bf16.mxu0 0
    %587 = vmatpush1.bf16.msra.mxu0 %v564
    %588 = vmatprep.subr.bf16.mxu0 0
    %589 = vmatpush1.bf16.msra.mxu0 %v565
    %590 = vmatprep.subr.bf16.mxu0 0
    %591 = vmatpush1.bf16.msra.mxu0 0
    %592 = vmatprep.subr.bf16.mxu0 0
    %593 = vmatpush1.bf16.msra.mxu0 0
    %594 = vmatprep.subr.bf16.mxu0 0
    %595 = vmatpush1.bf16.msra.mxu0 0
    %596 = vmatprep.subr.bf16.mxu0 0
    %597 = vmatpush1.bf16.msra.mxu0 0
    %598 = vmatprep.subr.bf16.mxu0 0
    %599 = vmatpush1.bf16.msra.mxu0 0
    %600 = vmatprep.subr.bf16.mxu0 0
    %601 = vmatpush1.bf16.msra.mxu0 0
    %602 = vmatprep.subr.bf16.mxu0 0
    %603 = vmatpush1.bf16.msra.mxu0 0
    %604 = vmatprep.subr.bf16.mxu0 0
    %605 = vmatpush1.bf16.msra.mxu0 0
    %606 = vmatprep.mubr.bf16.mxu0 0
    %607 = vmatmul.mubr.bf16.gmra.mrb[0].mxu0 %v500
    %v608 = vpop.f32.mrb[0].mxu0
    %v609 = vadd.f32 %v524, %v608
    %v610 = vpop.f32.mrb[0].mxu0
    %v611 = vpop.f32.mrb[0].mxu0
    %v612 = vadd.f32 %v524, %v611
    %v613 = vpop.f32.mrb[0].mxu0
    %614 = vmatprep.mubr.bf16.mxu0 0
    %615 = vmatmul.mubr.bf16.gmra.mrb[0].mxu0 %v501
    %v616 = vpop.f32.mrb[0].mxu0
    %v617 = vadd.f32 %v524, %v616
    %v618 = vpop.f32.mrb[0].mxu0
    %v619 = vpop.f32.mrb[0].mxu0
    %v620 = vadd.f32 %v524, %v619
    %v621 = vpop.f32.mrb[0].mxu0
    %622 = vmatprep.mubr.bf16.mxu0 0
    %623 = vmatmul.mubr.bf16.gmra.mrb[0].mxu0 %v502
    %v624 = vpop.f32.mrb[0].mxu0
    %v625 = vadd.f32 %v524, %v624
    %v626 = vpop.f32.mrb[0].mxu0
    %v627 = vpop.f32.mrb[0].mxu0
    %v628 = vadd.f32 %v524, %v627
    %v629 = vpop.f32.mrb[0].mxu0
    %630 = vdwg.mxu0
    %v631 = vmax.f32 %v609, 0.0
    %v632 = vmax.f32 %v612, 0.0
    %v633 = vmax.f32 %v617, 0.0
    %v634 = vmax.f32 %v620, 0.0
    %v635 = vmax.f32 %v625, 0.0
    %v636 = vmax.f32 %v628, 0.0
    %v637 = vpack.c.bf16 %v632, %v631
    %v638 = vpack.c.bf16 %v634, %v633
    %v639 = vpack.c.bf16 %v636, %v635
    %v640 = vld [vmem:[#allocation7] sm:$0xf]
    %v641 = vld [vmem:[#allocation7 + $0x4] sm:$0xf]
    %v642 = vld [vmem:[#allocation7 + $0x8] sm:$0xf]
    %v643 = vld [vmem:[#allocation7 + $0xc] sm:$0xf]
    %v644 = vld [vmem:[#allocation7 + $0x10] sm:$0xf]
    %v645 = vld [vmem:[#allocation7 + $0x14] sm:$0xf]
    %v646 = vld [vmem:[#allocation7 + $0x18] sm:$0xf]
    %v647 = vld [vmem:[#allocation7 + $0x1c] sm:$0xf]
    %v648 = vld [vmem:[#allocation7 + $0x20] sm:$0xf]
    %v649 = vld [vmem:[#allocation7 + $0x24] sm:$0xf]
    %v650 = vld [vmem:[#allocation7 + $0x28] sm:$0xf]
    %v651 = vld [vmem:[#allocation7 + $0x2c] sm:$0xf]
    %v652 = vld [vmem:[#allocation7 + $0x30] sm:$0xf]
    %v653 = vld [vmem:[#allocation7 + $0x34] sm:$0xf]
    %v654 = vld [vmem:[#allocation7 + $0x38] sm:$0xf]
    %v655 = vld [vmem:[#allocation7 + $0x3c] sm:$0xf]
    %v656 = vld [vmem:[%s9] sm:$0x1]
    %v658 = vlaneseq
    %v659 = vshrl.u32 %v658, 7
    %v660 = vsub.s32 0, %v659
    %v661 = vrot.slane %v656, %v660
    %v679 = vunpack.c.l.b16 %v640
    %v680 = vunpack.c.l.b16 %v641
    %v681 = vunpack.c.l.b16 %v642
    %v682 = vunpack.c.l.b16 %v643
    %v683 = vunpack.c.l.b16 %v644
    %v684 = vunpack.c.l.b16 %v645
    %v685 = vunpack.c.l.b16 %v646
    %v686 = vunpack.c.l.b16 %v647
    %v687 = vunpack.c.l.b16 %v648
    %v688 = vunpack.c.l.b16 %v649
    %v689 = vunpack.c.l.b16 %v650
    %v690 = vunpack.c.l.b16 %v651
    %v691 = vunpack.c.l.b16 %v652
    %v692 = vunpack.c.l.b16 %v653
    %v693 = vunpack.c.l.b16 %v654
    %v694 = vunpack.c.l.b16 %v655
    %v695 = vpack.c.b16 %v680, %v679
    %v696 = vpack.c.b16 %v682, %v681
    %v697 = vpack.c.b16 %v684, %v683
    %v698 = vpack.c.b16 %v686, %v685
    %v699 = vpack.c.b16 %v688, %v687
    %v700 = vpack.c.b16 %v690, %v689
    %v701 = vpack.c.b16 %v692, %v691
    %v702 = vpack.c.b16 %v694, %v693
    %711 = vmatprep.subr.bf16.mxu0 0
    %712 = vmatpush1.bf16.msra.mxu0 %v695
    %713 = vmatprep.subr.bf16.mxu0 0
    %714 = vmatpush1.bf16.msra.mxu0 %v696
    %715 = vmatprep.subr.bf16.mxu0 0
    %716 = vmatpush1.bf16.msra.mxu0 %v697
    %717 = vmatprep.subr.bf16.mxu0 0
    %718 = vmatpush1.bf16.msra.mxu0 %v698
    %719 = vmatprep.subr.bf16.mxu0 0
    %720 = vmatpush1.bf16.msra.mxu0 %v699
    %721 = vmatprep.subr.bf16.mxu0 0
    %722 = vmatpush1.bf16.msra.mxu0 %v700
    %723 = vmatprep.subr.bf16.mxu0 0
    %724 = vmatpush1.bf16.msra.mxu0 %v701
    %725 = vmatprep.subr.bf16.mxu0 0
    %726 = vmatpush1.bf16.msra.mxu0 %v702
    %727 = vmatprep.subr.bf16.mxu0 0
    %728 = vmatpush1.bf16.msra.mxu0 0
    %729 = vmatprep.subr.bf16.mxu0 0
    %730 = vmatpush1.bf16.msra.mxu0 0
    %731 = vmatprep.subr.bf16.mxu0 0
    %732 = vmatpush1.bf16.msra.mxu0 0
    %733 = vmatprep.subr.bf16.mxu0 0
    %734 = vmatpush1.bf16.msra.mxu0 0
    %735 = vmatprep.subr.bf16.mxu0 0
    %736 = vmatpush1.bf16.msra.mxu0 0
    %737 = vmatprep.subr.bf16.mxu0 0
    %738 = vmatpush1.bf16.msra.mxu0 0
    %739 = vmatprep.subr.bf16.mxu0 0
    %740 = vmatpush1.bf16.msra.mxu0 0
    %741 = vmatprep.subr.bf16.mxu0 0
    %742 = vmatpush1.bf16.msra.mxu0 0
    %743 = vmatprep.mubr.bf16.mxu0 0
    %744 = vmatmul.mubr.bf16.gmra.mrb[0].mxu0 %v637
    %v745 = vpop.f32.mrb[0].mxu0
    %v746 = vadd.f32 %v661, %v745
    %v747 = vpop.f32.mrb[0].mxu0
    %v748 = vpop.f32.mrb[0].mxu0
    %v749 = vadd.f32 %v661, %v748
    %v750 = vpop.f32.mrb[0].mxu0
    %751 = vmatprep.mubr.bf16.mxu0 0
    %752 = vmatmul.mubr.bf16.gmra.mrb[0].mxu0 %v638
    %v753 = vpop.f32.mrb[0].mxu0
    %v754 = vadd.f32 %v661, %v753
    %v755 = vpop.f32.mrb[0].mxu0
    %v756 = vpop.f32.mrb[0].mxu0
    %v757 = vadd.f32 %v661, %v756
    %v758 = vpop.f32.mrb[0].mxu0
    %759 = vmatprep.mubr.bf16.mxu0 0
    %760 = vmatmul.mubr.bf16.gmra.mrb[0].mxu0 %v639
    %v761 = vpop.f32.mrb[0].mxu0
    %v762 = vadd.f32 %v661, %v761
    %v763 = vpop.f32.mrb[0].mxu0
    %v764 = vpop.f32.mrb[0].mxu0
    %v765 = vadd.f32 %v661, %v764
    %v766 = vpop.f32.mrb[0].mxu0
    %767 = vdwg.mxu0
    %v768 = vmax.f32 %v746, 0.0
    %v769 = vmax.f32 %v749, 0.0
    %v770 = vmax.f32 %v754, 0.0
    %v771 = vmax.f32 %v757, 0.0
    %v772 = vmax.f32 %v762, 0.0
    %v773 = vmax.f32 %v765, 0.0
    %v774 = vpack.c.bf16 %v769, %v768
    %v775 = vpack.c.bf16 %v771, %v770
    %v776 = vpack.c.bf16 %v773, %v772
    %v777 = vld [vmem:[#allocation8] sm:$0xf]
    %v778 = vld [vmem:[#allocation8 + $0x4] sm:$0xf]
    %v779 = vld [vmem:[#allocation8 + $0x8] sm:$0xf]
    %v780 = vld [vmem:[#allocation8 + $0xc] sm:$0xf]
    %v781 = vld [vmem:[#allocation8 + $0x10] sm:$0xf]
    %v782 = vld [vmem:[#allocation8 + $0x14] sm:$0xf]
    %v783 = vld [vmem:[#allocation8 + $0x18] sm:$0xf]
    %v784 = vld [vmem:[#allocation8 + $0x1c] sm:$0xf]
    %v785 = vld [vmem:[#allocation8 + $0x20] sm:$0xf]
    %v786 = vld [vmem:[#allocation8 + $0x24] sm:$0xf]
    %v787 = vld [vmem:[#allocation8 + $0x28] sm:$0xf]
    %v788 = vld [vmem:[#allocation8 + $0x2c] sm:$0xf]
    %v789 = vld [vmem:[#allocation8 + $0x30] sm:$0xf]
    %v790 = vld [vmem:[#allocation8 + $0x34] sm:$0xf]
    %v791 = vld [vmem:[#allocation8 + $0x38] sm:$0xf]
    %v792 = vld [vmem:[#allocation8 + $0x3c] sm:$0xf]
    %v793 = vld [vmem:[%s11] sm:$0x1]
    %v795 = vlaneseq
    %v796 = vshrl.u32 %v795, 7
    %v797 = vsub.s32 0, %v796
    %v798 = vrot.slane %v793, %v797
    %v816 = vunpack.c.l.b16 %v777
    %v817 = vunpack.c.l.b16 %v778
    %v818 = vunpack.c.l.b16 %v779
    %v819 = vunpack.c.l.b16 %v780
    %v820 = vunpack.c.l.b16 %v781
    %v821 = vunpack.c.l.b16 %v782
    %v822 = vunpack.c.l.b16 %v783
    %v823 = vunpack.c.l.b16 %v784
    %v824 = vunpack.c.l.b16 %v785
    %v825 = vunpack.c.l.b16 %v786
    %v826 = vunpack.c.l.b16 %v787
    %v827 = vunpack.c.l.b16 %v788
    %v828 = vunpack.c.l.b16 %v789
    %v829 = vunpack.c.l.b16 %v790
    %v830 = vunpack.c.l.b16 %v791
    %v831 = vunpack.c.l.b16 %v792
    %v832 = vpack.c.b16 %v817, %v816
    %v833 = vpack.c.b16 %v819, %v818
    %v834 = vpack.c.b16 %v821, %v820
    %v835 = vpack.c.b16 %v823, %v822
    %v836 = vpack.c.b16 %v825, %v824
    %v837 = vpack.c.b16 %v827, %v826
    %v838 = vpack.c.b16 %v829, %v828
    %v839 = vpack.c.b16 %v831, %v830
    %848 = vmatprep.subr.bf16.mxu0 0
    %849 = vmatpush1.bf16.msra.mxu0 %v832
    %850 = vmatprep.subr.bf16.mxu0 0
    %851 = vmatpush1.bf16.msra.mxu0 %v833
    %852 = vmatprep.subr.bf16.mxu0 0
    %853 = vmatpush1.bf16.msra.mxu0 %v834
    %854 = vmatprep.subr.bf16.mxu0 0
    %855 = vmatpush1.bf16.msra.mxu0 %v835
    %856 = vmatprep.subr.bf16.mxu0 0
    %857 = vmatpush1.bf16.msra.mxu0 %v836
    %858 = vmatprep.subr.bf16.mxu0 0
    %859 = vmatpush1.bf16.msra.mxu0 %v837
    %860 = vmatprep.subr.bf16.mxu0 0
    %861 = vmatpush1.bf16.msra.mxu0 %v838
    %862 = vmatprep.subr.bf16.mxu0 0
    %863 = vmatpush1.bf16.msra.mxu0 %v839
    %864 = vmatprep.subr.bf16.mxu0 0
    %865 = vmatpush1.bf16.msra.mxu0 0
    %866 = vmatprep.subr.bf16.mxu0 0
    %867 = vmatpush1.bf16.msra.mxu0 0
    %868 = vmatprep.subr.bf16.mxu0 0
    %869 = vmatpush1.bf16.msra.mxu0 0
    %870 = vmatprep.subr.bf16.mxu0 0
    %871 = vmatpush1.bf16.msra.mxu0 0
    %872 = vmatprep.subr.bf16.mxu0 0
    %873 = vmatpush1.bf16.msra.mxu0 0
    %874 = vmatprep.subr.bf16.mxu0 0
    %875 = vmatpush1.bf16.msra.mxu0 0
    %876 = vmatprep.subr.bf16.mxu0 0
    %877 = vmatpush1.bf16.msra.mxu0 0
    %878 = vmatprep.subr.bf16.mxu0 0
    %879 = vmatpush1.bf16.msra.mxu0 0
    %880 = vmatprep.mubr.bf16.mxu0 0
    %881 = vmatmul.mubr.bf16.gmra.mrb[0].mxu0 %v774
    %v882 = vpop.f32.mrb[0].mxu0
    %v883 = vadd.f32 %v798, %v882
    %v884 = vpop.f32.mrb[0].mxu0
    %v885 = vpop.f32.mrb[0].mxu0
    %v886 = vadd.f32 %v798, %v885
    %v887 = vpop.f32.mrb[0].mxu0
    %888 = vmatprep.mubr.bf16.mxu0 0
    %889 = vmatmul.mubr.bf16.gmra.mrb[0].mxu0 %v775
    %v890 = vpop.f32.mrb[0].mxu0
    %v891 = vadd.f32 %v798, %v890
    %v892 = vpop.f32.mrb[0].mxu0
    %v893 = vpop.f32.mrb[0].mxu0
    %v894 = vadd.f32 %v798, %v893
    %v895 = vpop.f32.mrb[0].mxu0
    %896 = vmatprep.mubr.bf16.mxu0 0
    %897 = vmatmul.mubr.bf16.gmra.mrb[0].mxu0 %v776
    %v898 = vpop.f32.mrb[0].mxu0
    %v899 = vadd.f32 %v798, %v898
    %v900 = vpop.f32.mrb[0].mxu0
    %v901 = vpop.f32.mrb[0].mxu0
    %v902 = vadd.f32 %v798, %v901
    %v903 = vpop.f32.mrb[0].mxu0
    %904 = vdwg.mxu0
    %v905 = vld [vmem:[#allocation10] sm:$0xf]
    %v906 = vld [vmem:[#allocation10 + $0x4] sm:$0xf]
    %v907 = vld [vmem:[#allocation10 + $0x8] sm:$0xf]
    %v908 = vld [vmem:[#allocation10 + $0xc] sm:$0xf]
    %v909 = vld [vmem:[#allocation10 + $0x10] sm:$0xf]
    %v910 = vld [vmem:[#allocation10 + $0x14] sm:$0xf]
    %v911 = vld [vmem:[#allocation10 + $0x18] sm:$0xf]
    %v912 = vld [vmem:[#allocation10 + $0x1c] sm:$0xf]
    %v913 = vld [vmem:[#allocation10 + $0x20] sm:$0xf]
    %v914 = vld [vmem:[#allocation10 + $0x24] sm:$0xf]
    %v915 = vld [vmem:[#allocation10 + $0x28] sm:$0xf]
    %v916 = vld [vmem:[#allocation10 + $0x2c] sm:$0xf]
    %v917 = vld [vmem:[#allocation10 + $0x30] sm:$0xf]
    %v918 = vld [vmem:[#allocation10 + $0x34] sm:$0xf]
    %v919 = vld [vmem:[#allocation10 + $0x38] sm:$0xf]
    %v920 = vld [vmem:[#allocation10 + $0x3c] sm:$0xf]
    %v921 = vld [vmem:[%s13] sm:$0x1]
    %v923 = vlaneseq
    %v924 = vshrl.u32 %v923, 7
    %v925 = vsub.s32 0, %v924
    %v926 = vrot.slane %v921, %v925
    %v944 = vunpack.c.l.b16 %v905
    %v945 = vunpack.c.l.b16 %v906
    %v946 = vunpack.c.l.b16 %v907
    %v947 = vunpack.c.l.b16 %v908
    %v948 = vunpack.c.l.b16 %v909
    %v949 = vunpack.c.l.b16 %v910
    %v950 = vunpack.c.l.b16 %v911
    %v951 = vunpack.c.l.b16 %v912
    %v952 = vunpack.c.l.b16 %v913
    %v953 = vunpack.c.l.b16 %v914
    %v954 = vunpack.c.l.b16 %v915
    %v955 = vunpack.c.l.b16 %v916
    %v956 = vunpack.c.l.b16 %v917
    %v957 = vunpack.c.l.b16 %v918
    %v958 = vunpack.c.l.b16 %v919
    %v959 = vunpack.c.l.b16 %v920
    %v960 = vpack.c.b16 %v945, %v944
    %v961 = vpack.c.b16 %v947, %v946
    %v962 = vpack.c.b16 %v949, %v948
    %v963 = vpack.c.b16 %v951, %v950
    %v964 = vpack.c.b16 %v953, %v952
    %v965 = vpack.c.b16 %v955, %v954
    %v966 = vpack.c.b16 %v957, %v956
    %v967 = vpack.c.b16 %v959, %v958
    %976 = vmatprep.subr.bf16.mxu0 0
    %977 = vmatpush1.bf16.msra.mxu0 %v960
    %978 = vmatprep.subr.bf16.mxu0 0
    %979 = vmatpush1.bf16.msra.mxu0 %v961
    %980 = vmatprep.subr.bf16.mxu0 0
    %981 = vmatpush1.bf16.msra.mxu0 %v962
    %982 = vmatprep.subr.bf16.mxu0 0
    %983 = vmatpush1.bf16.msra.mxu0 %v963
    %984 = vmatprep.subr.bf16.mxu0 0
    %985 = vmatpush1.bf16.msra.mxu0 %v964
    %986 = vmatprep.subr.bf16.mxu0 0
    %987 = vmatpush1.bf16.msra.mxu0 %v965
    %988 = vmatprep.subr.bf16.mxu0 0
    %989 = vmatpush1.bf16.msra.mxu0 %v966
    %990 = vmatprep.subr.bf16.mxu0 0
    %991 = vmatpush1.bf16.msra.mxu0 %v967
    %992 = vmatprep.subr.bf16.mxu0 0
    %993 = vmatpush1.bf16.msra.mxu0 0
    %994 = vmatprep.subr.bf16.mxu0 0
    %995 = vmatpush1.bf16.msra.mxu0 0
    %996 = vmatprep.subr.bf16.mxu0 0
    %997 = vmatpush1.bf16.msra.mxu0 0
    %998 = vmatprep.subr.bf16.mxu0 0
    %999 = vmatpush1.bf16.msra.mxu0 0
    %1000 = vmatprep.subr.bf16.mxu0 0
    %1001 = vmatpush1.bf16.msra.mxu0 0
    %1002 = vmatprep.subr.bf16.mxu0 0
    %1003 = vmatpush1.bf16.msra.mxu0 0
    %1004 = vmatprep.subr.bf16.mxu0 0
    %1005 = vmatpush1.bf16.msra.mxu0 0
    %1006 = vmatprep.subr.bf16.mxu0 0
    %1007 = vmatpush1.bf16.msra.mxu0 0
    %1008 = vmatprep.mubr.bf16.mxu0 0
    %1009 = vmatmul.mubr.bf16.gmra.mrb[0].mxu0 %v774
    %v1010 = vpop.f32.mrb[0].mxu0
    %v1011 = vadd.f32 %v926, %v1010
    %v1012 = vpop.f32.mrb[0].mxu0
    %v1013 = vpop.f32.mrb[0].mxu0
    %v1014 = vadd.f32 %v926, %v1013
    %v1015 = vpop.f32.mrb[0].mxu0
    %1016 = vmatprep.mubr.bf16.mxu0 0
    %1017 = vmatmul.mubr.bf16.gmra.mrb[0].mxu0 %v775
    %v1018 = vpop.f32.mrb[0].mxu0
    %v1019 = vadd.f32 %v926, %v1018
    %v1020 = vpop.f32.mrb[0].mxu0
    %v1021 = vpop.f32.mrb[0].mxu0
    %v1022 = vadd.f32 %v926, %v1021
    %v1023 = vpop.f32.mrb[0].mxu0
    %1024 = vmatprep.mubr.bf16.mxu0 0
    %1025 = vmatmul.mubr.bf16.gmra.mrb[0].mxu0 %v776
    %v1026 = vpop.f32.mrb[0].mxu0
    %v1027 = vadd.f32 %v926, %v1026
    %v1028 = vpop.f32.mrb[0].mxu0
    %v1029 = vpop.f32.mrb[0].mxu0
    %v1030 = vadd.f32 %v926, %v1029
    %v1031 = vpop.f32.mrb[0].mxu0
    %1032 = vdwg.mxu0
    %v1033 = vmax.f32 %v1011, %v1019
    %v1034 = vmax.f32 %v1033, %v1014
    %v1035 = vmax.f32 %v1022, %v1030
    %v1036 = vmax.f32 %v1035, %v1027
    %v1037 = vsub.f32 %v1011, %v1034
    %v1038 = vsub.f32 %v1014, %v1034
    %v1039 = vsub.f32 %v1019, %v1034
    %v1040 = vsub.f32 %v1022, %v1036
    %v1041 = vsub.f32 %v1027, %v1036
    %v1042 = vsub.f32 %v1030, %v1036
    %v1043 = vmul.f32 %v1037, 1.442695
    %v1044 = vpow.pop %v1043
    %v1045 = vmul.f32 %v1038, 1.442695
    %v1046 = vpow.pop %v1045
    %v1047 = vmul.f32 %v1039, 1.442695
    %v1048 = vpow.pop %v1047
    %v1049 = vmul.f32 %v1040, 1.442695
    %v1050 = vpow.pop %v1049
    %v1051 = vmul.f32 %v1041, 1.442695
    %v1052 = vpow.pop %v1051
    %v1053 = vmul.f32 %v1042, 1.442695
    %v1054 = vpow.pop %v1053
    %v1055 = vadd.f32 %v1044, %v1046
    %v1056 = vadd.f32 %v1055, %v1048
    %v1057 = vadd.f32 %v1050, %v1052
    %v1058 = vadd.f32 %v1057, %v1054
    %v1059 = vrcp.pop %v1056
    %v1060 = vrcp.pop %v1058
    %v1061 = vmul.f32 %v1044, %v1059
    %v1062 = vmul.f32 %v1046, %v1059
    %v1063 = vmul.f32 %v1048, %v1059
    %v1064 = vmul.f32 %v1050, %v1060
    %v1065 = vmul.f32 %v1052, %v1060
    %v1066 = vmul.f32 %v1054, %v1060
    %v1067 = vmul.f32 %v883, %v1061
    %v1068 = vmul.f32 %v886, %v1062
    %v1069 = vmul.f32 %v891, %v1063
    %v1070 = vmul.f32 %v894, %v1064
    %v1071 = vmul.f32 %v899, %v1065
    %v1072 = vmul.f32 %v902, %v1066
    %v1073 = vadd.f32 %v1067, %v1068
    %v1074 = vadd.f32 %v1073, %v1069
    %v1075 = vadd.f32 %v1070, %v1071
    %v1076 = vadd.f32 %v1075, %v1072
    %v1077 = vlaneseq
    %v1078 = vand.u32 %v1077, 127
    %vm1079 = vcmp.eq.s32.totalorder %v1078, 48
    %v1080 = vsel %vm1079, %v1061, 0.0
    %v1081 = vsel %vm1079, %v1064, 0.0
    %v1082 = vadd.f32 %v1080, 0.0
    %v1083 = vadd.f32 %v1081, 0.0
    %vm1084 = vcmp.eq.s32.totalorder %v1078, 49
    %v1085 = vsel %vm1084, %v1062, 0.0
    %v1086 = vsel %vm1084, %v1065, 0.0
    %v1087 = vadd.f32 %v1082, %v1085
    %v1088 = vadd.f32 %v1083, %v1086
    %vm1089 = vcmp.eq.s32.totalorder %v1078, 50
    %v1090 = vsel %vm1089, %v1063, 0.0
    %v1091 = vsel %vm1089, %v1066, 0.0
    %v1092 = vadd.f32 %v1087, %v1090
    %v1093 = vadd.f32 %v1088, %v1091
    %v1094 = vadd.f32 %v1074, %v1092
    %v1095 = vadd.f32 %v1076, %v1093
    %1096 = vst [vmem:[#allocation11] sm:$0xff] %v1094
    %1097 = vst [vmem:[#allocation11 + $0x8] sm:$0xff] %v1095
    // Predicated region
    $region78: #{tpu_custom_call.1} parent=1 // pred_check
      _
    $region79: #{tpu_custom_call.1} parent=1 // pred_check_branch
      %1099 = sbr.rel (0) target = $region81
    $region80: #{tpu_custom_call.1} parent=1 // pred_region
      %s1101 = ssub.s32 256, 256
      %1102 = vsyncadd [#allocation4], %s1101
      %s1103 = sshll.u32 [#allocation11], 4
      %s1104 = int_to_ptr.vmem [resolvable:$true] %s1103
      %1109 = dma.vmem_to_hbm [thread:$0]  %s1104, 256, %s14, [#allocation4], 128, 128, 8
    $region81: #{tpu_custom_call.1} parent=1 // pred_fallthru
      _
    // Predicated region
    $region82: #{tpu_custom_call.1} parent=1 // pred_check
      _
    $region83: #{tpu_custom_call.1} parent=1 // pred_check_branch
      %1111 = sbr.rel (0) target = $region85
    $region84: #{tpu_custom_call.1} parent=1 // pred_region
      %1112 = dma.done [#allocation4], 256
    $region85: #{tpu_custom_call.1} parent=1 // pred_fallthru
      _
    %1113 = vsyncpa [#allocation3], 1
    %1114 = vsyncpa [#allocation6], 1
    %1115 = vsyncpa [#allocation9], 1
    %1116 = vsyncpa [#allocation4], 1

</llo_original>
